<compile_context>
chip_gen: v7x
topology: tpu7x:2x2x1
jax: 0.10.0
libtpu: 0.0.40
codegen_flags: <defaults>
</compile_context>

<pallas_src>
import functools

import jax
import jax.numpy as jnp
from jax.experimental import pallas as pl
from jax.experimental.pallas import tpu as pltpu

HIDDEN = 256  # fixed by nn.Linear(256, 256) in the module


def _attention_kernel(h_ref, d_ref, w1_ref, b12_ref, w2_ref, vw_ref, bv_ref,
                      o_ref, *, s_valid):
    # h_ref: (TB*S, H) bf16   d_ref: (TB, H) bf16
    # w1/w2: (H, H) bf16 laid out (in, out)   b12/vw: (1, H) f32
    # bv: (1, 1) f32 scalar in SMEM           o_ref: (TB, H) f32
    tb, H = d_ref.shape
    s_pad = h_ref.shape[0] // tb

    hb = h_ref[...]                                                  # (TB*S, H) bf16

    # w1(h): one big MXU matmul over all fused rows (bf16 in, f32 accumulate).
    z2 = jnp.dot(hb, w1_ref[...], preferred_element_type=jnp.float32)        # (TB*S, H)
    # w2(d): once per block.
    zd = jnp.dot(d_ref[...], w2_ref[...], preferred_element_type=jnp.float32)  # (TB, H)

    # f32 reshape is a layout no-op because s_pad % 8 == 0.
    z3 = z2.reshape(tb, s_pad, H) + b12_ref[...] + zd[:, None, :]    # (TB, S, H) f32
    t3 = jnp.tanh(z3)

    # v(t): lane reduce over H -> lane-major logits (TB, S).
    u = jnp.sum(t3 * vw_ref[...], axis=-1) + bv_ref[0, 0]            # (TB, S) f32

    if s_valid < s_pad:  # mask padded S columns before the softmax
        col = jax.lax.broadcasted_iota(jnp.int32, (tb, s_pad), 1)
        u = jnp.where(col < s_valid, u, -1e30)

    # softmax over S (lane axis); reciprocal on the EUP approx path.
    m = jnp.max(u, axis=-1, keepdims=True)
    e = jnp.exp(u - m)
    a = e * pl.reciprocal(jnp.sum(e, axis=-1, keepdims=True), approx=True)

    # bmm(a.unsqueeze(1), h): broadcast-multiply + sublane reduce over S.
    hf = hb.astype(jnp.float32).reshape(tb, s_pad, H)                # f32 reshape: no-op
    o_ref[...] = jnp.sum(a[:, :, None] * hf, axis=1)                 # (TB, H)


def _pick_tb(batch, s_pad):
    """Batch-tile size: ~2048 fused MXU rows, explicit VMEM budget, >=2 grid
    steps for v7x's two TensorCores when B > 8 (tile kept a multiple of 8)."""
    target_rows = 2048                       # ~1 MiB bf16 h block per step
    tb = max(1, target_rows // s_pad)

    # VMEM bytes per fused batch element per grid step.
    per_elem = (2 * s_pad * HIDDEN * 2       # bf16 h block, double-buffered
                + 4 * s_pad * HIDDEN * 4     # f32 intermediates (z2/z3/t3/hf)
                + 2 * HIDDEN * 2             # bf16 d block, double-buffered
                + 2 * HIDDEN * 4)            # f32 out block, double-buffered
    resident = 2 * (2 * HIDDEN * HIDDEN * 2) + 2 * (2 * HIDDEN * 4)  # w1/w2 + b12/vw
    budget = 12 * 1024 * 1024                # << v7x 64 MiB VMEM; <= raised scoped limit
    tb = min(tb, max(1, (budget - resident) // per_elem))

    if batch <= 8:
        # Single aligned block (block dims == full dims); work is trivial here.
        return batch
    # >= 2 grid steps (v7x has 2 TensorCores); keep tb a multiple of 8 so the
    # (tb, H) d/out blocks stay (8,128)-aligned.
    tb = max(8, (min(tb, pl.cdiv(batch, 2)) // 8) * 8)
    return tb


def attention_pallas(h, d, w1, b1, w2, b2, vw, bv):
    """h: (B, S, H) f32, d: (B, 1, H) f32.
    w1, w2: (H, H) laid out as (in, out).  b1, b2: (1, H); vw: (1, H); bv: (1, 1).
    Returns (B, 1, H) f32."""
    B, S, H = h.shape
    assert H == HIDDEN

    # Pad S to a multiple of 8 so all in-kernel f32 reshapes are layout no-ops.
    s_pad = ((S + 7) // 8) * 8
    if s_pad != S:
        h = jnp.pad(h, ((0, 0), (0, s_pad - S), (0, 0)))

    tb = _pick_tb(B, s_pad)
    n_blocks = pl.cdiv(B, tb)
    b_pad = n_blocks * tb

    h2 = h.reshape(B * s_pad, H)             # free reshape on contiguous f32
    d2 = d.reshape(B, H)
    if b_pad != B:                           # zero h/d rows -> zero output, sliced off
        h2 = jnp.pad(h2, ((0, (b_pad - B) * s_pad), (0, 0)))
        d2 = jnp.pad(d2, ((0, b_pad - B), (0, 0)))

    # bf16 MXU operands (f32 accumulation stays inside the kernel).  In a real
    # model h/d would already arrive in bf16 from the producing layer.
    h2 = h2.astype(jnp.bfloat16)
    d2 = d2.astype(jnp.bfloat16)
    w1b = w1.astype(jnp.bfloat16)
    w2b = w2.astype(jnp.bfloat16)
    b12 = (b1 + b2).reshape(1, H).astype(jnp.float32)   # fold the two Linear biases
    vw2 = vw.reshape(1, H).astype(jnp.float32)
    bv2 = bv.reshape(1, 1).astype(jnp.float32)

    kernel = functools.partial(_attention_kernel, s_valid=S)

    out = pl.pallas_call(
        kernel,
        out_shape=jax.ShapeDtypeStruct((b_pad, H), jnp.float32),
        grid_spec=pltpu.PrefetchScalarGridSpec(
            num_scalar_prefetch=0,
            grid=(n_blocks,),
            in_specs=[
                pl.BlockSpec((tb * s_pad, H), lambda i: (i, 0)),  # h (bf16, streamed)
                pl.BlockSpec((tb, H), lambda i: (i, 0)),          # d (bf16, streamed)
                pl.BlockSpec((H, H), lambda i: (0, 0)),           # w1 (resident)
                pl.BlockSpec((1, H), lambda i: (0, 0)),           # b1+b2 (resident)
                pl.BlockSpec((H, H), lambda i: (0, 0)),           # w2 (resident)
                pl.BlockSpec((1, H), lambda i: (0, 0)),           # v weight (resident)
                pl.BlockSpec(memory_space=pltpu.SMEM),            # v bias scalar
            ],
            out_specs=pl.BlockSpec((tb, H), lambda i: (i, 0)),
        ),
        compiler_params=pltpu.CompilerParams(
            dimension_semantics=("parallel",),
            vmem_limit_bytes=32 * 1024 * 1024,
        ),
    )(h2, d2, w1b, b12, w2b, vw2, bv2)

    return out[:B].reshape(B, 1, H)


def attention_reference(h, d, w1, b1, w2, b2, vw, bv):
    """Pure-JAX f32 reference matching PyTorch semantics."""
    z = jnp.einsum("bsh,hk->bsk", h, w1) + b1 + \
        jnp.einsum("boh,hk->bok", d, w2) + b2          # (B, S, H)
    t = jnp.tanh(z)
    u = jnp.sum(t * vw, axis=-1) + bv[0, 0]            # (B, S)
    a = jax.nn.softmax(u, axis=1)                      # softmax over S
    return jnp.einsum("bs,bsh->bh", a, h)[:, None, :]  # (B, 1, H)


if __name__ == "__main__":
    key = jax.random.PRNGKey(0)
    H = HIDDEN
    ks = jax.random.split(key, 12)
    bound = 1.0 / jnp.sqrt(jnp.float32(H))

    # Deterministic "nn.Linear"-style params, generated directly in (in, out)
    # layout so the kernel computes x @ W.
    w1 = jax.random.uniform(ks[0], (H, H), jnp.float32, -bound, bound)
    b1 = jax.random.uniform(ks[1], (1, H), jnp.float32, -bound, bound)
    w2 = jax.random.uniform(ks[2], (H, H), jnp.float32, -bound, bound)
    b2 = jax.random.uniform(ks[3], (1, H), jnp.float32, -bound, bound)
    vw = jax.random.uniform(ks[4], (1, H), jnp.float32, -bound, bound)
    bv = jax.random.uniform(ks[5], (1, 1), jnp.float32, -bound, bound)

    def check(h, d, atol):
        out = jax.block_until_ready(
            attention_pallas(h, d, w1, b1, w2, b2, vw, bv))
        ref = attention_reference(h, d, w1, b1, w2, b2, vw, bv)
        assert out.shape == ref.shape, (out.shape, ref.shape)
        err = float(jnp.max(jnp.abs(out - ref)))
        assert jnp.allclose(out, ref, atol=atol, rtol=atol), err

    # bf16 MXU operands (f32 accumulation, f32 softmax/epilogue) -> loosened
    # tolerance vs the pure-f32 reference.
    TOL = 3e-2

    # Small case: B=2, S=8 (single aligned block).
    h = jax.random.normal(ks[6], (2, 8, H), jnp.float32)
    d = jax.random.normal(ks[7], (2, 1, H), jnp.float32)
    check(h, d, TOL)

    # Batched path: B=48, S=8 -> tb=24, 2 grid steps, no padding.
    h2 = jax.random.normal(ks[8], (48, 8, H), jnp.float32)
    d2 = jax.random.normal(ks[9], (48, 1, H), jnp.float32)
    check(h2, d2, TOL)

    # Padding path: S=12 -> 16 (masked softmax), B=20 -> tb=8, 3 steps, batch pad.
    h3 = jax.random.normal(ks[10], (20, 12, H), jnp.float32)
    d3 = jax.random.normal(ks[11], (20, 1, H), jnp.float32)
    check(h3, d3, TOL)

    print("KERNEL_OK")
</pallas_src>

<mosaic_0001>
module attributes {stable_mosaic.version = 11 : i64} {
  func.func @_attention_kernel(%arg0: i32, %arg1: memref<16x256xbf16, #tpu.memory_space<vmem>>, %arg2: memref<2x256xbf16, #tpu.memory_space<vmem>>, %arg3: memref<256x256xbf16, #tpu.memory_space<vmem>>, %arg4: memref<1x256xf32, #tpu.memory_space<vmem>>, %arg5: memref<256x256xbf16, #tpu.memory_space<vmem>>, %arg6: memref<1x256xf32, #tpu.memory_space<vmem>>, %arg7: memref<1x1xf32, #tpu.memory_space<smem>>, %arg8: memref<2x256xf32, #tpu.memory_space<vmem>>) attributes {dimension_semantics = [#tpu.dimension_semantics<parallel>], iteration_bounds = array<i64: 1>, scalar_prefetch = 0 : i64, scratch_operands = 0 : i64, tpu.core_type = #tpu.core_type<tc>, window_params = [{transform_indices = @transform_0, window_bounds = array<i64: 16, 256>}, {transform_indices = @transform_1, window_bounds = array<i64: 2, 256>}, {pipeline_mode = #tpu.pipeline_mode<synchronous>, transform_indices = @transform_2, window_bounds = array<i64: 256, 256>}, {pipeline_mode = #tpu.pipeline_mode<synchronous>, transform_indices = @transform_3, window_bounds = array<i64: 1, 256>}, {pipeline_mode = #tpu.pipeline_mode<synchronous>, transform_indices = @transform_4, window_bounds = array<i64: 256, 256>}, {pipeline_mode = #tpu.pipeline_mode<synchronous>, transform_indices = @transform_5, window_bounds = array<i64: 1, 256>}, {transform_indices = @transform_6, window_bounds = array<i64: 1, 1>}, {transform_indices = @transform_7, window_bounds = array<i64: 2, 256>}]} {
    %c0 = arith.constant 0 : index
    %c0_0 = arith.constant 0 : index
    %0 = vector.load %arg1[%c0, %c0_0] : memref<16x256xbf16, #tpu.memory_space<vmem>>, vector<16x256xbf16>
    %c0_1 = arith.constant 0 : index
    %c0_2 = arith.constant 0 : index
    %1 = vector.load %arg3[%c0_1, %c0_2] : memref<256x256xbf16, #tpu.memory_space<vmem>>, vector<256x256xbf16>
    %cst = arith.constant dense<0.000000e+00> : vector<16x256xf32>
    %2 = tpu.matmul %0, %1, %cst {dimension_numbers = #tpu.dot_dimension_numbers<[1], [0], [0], [1], [0, 0, 1, 1], [], []>} : vector<16x256xbf16>, vector<256x256xbf16>, vector<16x256xf32> -> vector<16x256xf32>
    %c0_3 = arith.constant 0 : index
    %c0_4 = arith.constant 0 : index
    %3 = vector.load %arg2[%c0_3, %c0_4] : memref<2x256xbf16, #tpu.memory_space<vmem>>, vector<2x256xbf16>
    %c0_5 = arith.constant 0 : index
    %c0_6 = arith.constant 0 : index
    %4 = vector.load %arg5[%c0_5, %c0_6] : memref<256x256xbf16, #tpu.memory_space<vmem>>, vector<256x256xbf16>
    %cst_7 = arith.constant dense<0.000000e+00> : vector<2x256xf32>
    %5 = tpu.matmul %3, %4, %cst_7 {dimension_numbers = #tpu.dot_dimension_numbers<[1], [0], [0], [1], [0, 0, 1, 1], [], []>} : vector<2x256xbf16>, vector<256x256xbf16>, vector<2x256xf32> -> vector<2x256xf32>
    %6 = vector.shape_cast %2 : vector<16x256xf32> to vector<2x8x256xf32>
    %c0_8 = arith.constant 0 : index
    %c0_9 = arith.constant 0 : index
    %7 = vector.load %arg4[%c0_8, %c0_9] : memref<1x256xf32, #tpu.memory_space<vmem>>, vector<1x256xf32>
    %8 = vector.shape_cast %7 : vector<1x256xf32> to vector<1x1x256xf32>
    %9 = vector.broadcast %8 : vector<1x1x256xf32> to vector<2x8x256xf32>
    %10 = arith.addf %6, %9 : vector<2x8x256xf32>
    %11 = vector.shape_cast %5 : vector<2x256xf32> to vector<2x1x256xf32>
    %12 = vector.broadcast %11 : vector<2x1x256xf32> to vector<2x8x256xf32>
    %13 = arith.addf %10, %12 : vector<2x8x256xf32>
    %14 = math.tanh %13 : vector<2x8x256xf32>
    %c0_10 = arith.constant 0 : index
    %c0_11 = arith.constant 0 : index
    %15 = vector.load %arg6[%c0_10, %c0_11] : memref<1x256xf32, #tpu.memory_space<vmem>>, vector<1x256xf32>
    %16 = vector.shape_cast %15 : vector<1x256xf32> to vector<1x1x256xf32>
    %17 = vector.broadcast %16 : vector<1x1x256xf32> to vector<2x8x256xf32>
    %18 = arith.mulf %14, %17 : vector<2x8x256xf32>
    %cst_12 = arith.constant dense<0.000000e+00> : vector<2x8xf32>
    %19 = vector.multi_reduction <add>, %18, %cst_12 [2] : vector<2x8x256xf32> to vector<2x8xf32>
    %c0_13 = arith.constant 0 : index
    %c0_14 = arith.constant 0 : index
    %20 = memref.load %arg7[%c0_13, %c0_14] : memref<1x1xf32, #tpu.memory_space<smem>>
    %21 = vector.broadcast %20 : f32 to vector<2x8xf32>
    %22 = arith.addf %19, %21 : vector<2x8xf32>
    %cst_15 = arith.constant dense<0xFF800000> : vector<2xf32>
    %23 = vector.multi_reduction <maximumf>, %22, %cst_15 [1] : vector<2x8xf32> to vector<2xf32>
    %24 = vector.shape_cast %23 : vector<2xf32> to vector<2x1xf32>
    %25 = vector.broadcast %24 : vector<2x1xf32> to vector<2x8xf32>
    %26 = arith.subf %22, %25 : vector<2x8xf32>
    %27 = math.exp %26 : vector<2x8xf32>
    %cst_16 = arith.constant dense<0.000000e+00> : vector<2xf32>
    %28 = vector.multi_reduction <add>, %27, %cst_16 [1] : vector<2x8xf32> to vector<2xf32>
    %29 = vector.shape_cast %28 : vector<2xf32> to vector<2x1xf32>
    %30 = tpu.reciprocal %29 {approx = true} : vector<2x1xf32> -> vector<2x1xf32>
    %31 = vector.broadcast %30 : vector<2x1xf32> to vector<2x8xf32>
    %32 = arith.mulf %27, %31 : vector<2x8xf32>
    %33 = arith.extf %0 : vector<16x256xbf16> to vector<16x256xf32>
    %34 = vector.shape_cast %33 : vector<16x256xf32> to vector<2x8x256xf32>
    %35 = vector.shape_cast %32 : vector<2x8xf32> to vector<2x8x1xf32>
    %36 = vector.broadcast %35 : vector<2x8x1xf32> to vector<2x8x256xf32>
    %37 = arith.mulf %36, %34 : vector<2x8x256xf32>
    %cst_17 = arith.constant dense<0.000000e+00> : vector<2x256xf32>
    %38 = vector.multi_reduction <add>, %37, %cst_17 [1] : vector<2x8x256xf32> to vector<2x256xf32>
    %c0_18 = arith.constant 0 : index
    %c0_19 = arith.constant 0 : index
    %39 = vector.load %arg8[%c0_18, %c0_19] : memref<2x256xf32, #tpu.memory_space<vmem>>, vector<2x256xf32>
    tpu.vector_store %arg8[%c0_18, %c0_19], %38 {strides = array<i32>} : memref<2x256xf32, #tpu.memory_space<vmem>>, vector<2x256xf32>,
    return
  }
  func.func @transform_0(%arg0: i32) -> (i32, i32) {
    %c0_i32 = arith.constant 0 : i32
    %c0_i32_0 = arith.constant 0 : i32
    return %arg0, %c0_i32 : i32, i32
  }
  func.func @transform_1(%arg0: i32) -> (i32, i32) {
    %c0_i32 = arith.constant 0 : i32
    %c0_i32_0 = arith.constant 0 : i32
    return %arg0, %c0_i32 : i32, i32
  }
  func.func @transform_2(%arg0: i32) -> (i32, i32) {
    %c0_i32 = arith.constant 0 : i32
    %c0_i32_0 = arith.constant 0 : i32
    %c0_i32_1 = arith.constant 0 : i32
    return %c0_i32, %c0_i32_0 : i32, i32
  }
  func.func @transform_3(%arg0: i32) -> (i32, i32) {
    %c0_i32 = arith.constant 0 : i32
    %c0_i32_0 = arith.constant 0 : i32
    %c0_i32_1 = arith.constant 0 : i32
    return %c0_i32, %c0_i32_0 : i32, i32
  }
  func.func @transform_4(%arg0: i32) -> (i32, i32) {
    %c0_i32 = arith.constant 0 : i32
    %c0_i32_0 = arith.constant 0 : i32
    %c0_i32_1 = arith.constant 0 : i32
    return %c0_i32, %c0_i32_0 : i32, i32
  }
  func.func @transform_5(%arg0: i32) -> (i32, i32) {
    %c0_i32 = arith.constant 0 : i32
    %c0_i32_0 = arith.constant 0 : i32
    %c0_i32_1 = arith.constant 0 : i32
    return %c0_i32, %c0_i32_0 : i32, i32
  }
  func.func @transform_6(%arg0: i32) -> (i32, i32) {
    %c0_i32 = arith.constant 0 : i32
    %c0_i32_0 = arith.constant 0 : i32
    %c0_i32_1 = arith.constant 0 : i32
    return %c0_i32, %c0_i32_0 : i32, i32
  }
  func.func @transform_7(%arg0: i32) -> (i32, i32) {
    %c0_i32 = arith.constant 0 : i32
    %c0_i32_0 = arith.constant 0 : i32
    return %arg0, %c0_i32 : i32, i32
  }
}

</mosaic_0001>

<llo_original>
// kernel: tpu_custom_call.1
$region0: #{tpu_custom_call.1}
  #allocation0 [shape = 'u32[]', space=smem, size = 0x4, offset = 0x4, fixed_abs, tag = 'smem constant byte address 0x4 - core index']
  #allocation1 [shape = 'u32[144,128]{1,0:T(1,128)}', space=vmem, size = 0x12000, scoped, tag = 'internal scratch']
  #allocation2 [shape = 'f32[1,1]{1,0:T(1,128)S(6)}', space=smem, size = 0x200, scoped, tag = 'scoped memory for tpu_custom_call.1']
  %s0 = inlined_call_operand.hbm [shape: bf16[16,256], index: 0, kind: input, shape index: {}]
  %s1 = inlined_call_operand.vmem [shape: bf16[2,256], index: 1, kind: input, shape index: {}]
  %s2 = inlined_call_operand.hbm [shape: bf16[256,256], index: 2, kind: input, shape index: {}]
  %s3 = inlined_call_operand.vmem [shape: f32[1,256], index: 3, kind: input, shape index: {}]
  %s4 = inlined_call_operand.hbm [shape: bf16[256,256], index: 4, kind: input, shape index: {}]
  %s5 = inlined_call_operand.vmem [shape: f32[1,256], index: 5, kind: input, shape index: {}]
  %s6 = inlined_call_operand.<no memory space> [shape: f32[1,1], index: 6, kind: input, shape index: {}]
  %s7 = inlined_call_operand.hbm [shape: f32[2,256], index: 7, kind: output, shape index: {}]
  %s8 = sld [smem:[#allocation0]]
  $region50: #{tpu_custom_call.1} parent=0
    _
  %s10 = ssub.s32 1, %s8
  %s11 = scalar_select 0, %s10, %s8
  %12 = sst [smem:[#allocation2]] %s6
  $region1: #{tpu_custom_call.1} parent=0
    #allocation3 [shape = 'u8[8192]{0}', space=vmem, size = 0x2000, scoped, tag = 'input window, operand 0, single buffered']
    #allocation4 [shape = 's32[1]{0}', space=sflag, size = 0x4, scoped, tag = 'scoped memory for tpu_custom_call.1']
    #allocation5 [shape = 's32[1]{0}', space=sflag, size = 0x4, scoped, tag = 'scoped memory for tpu_custom_call.1']
    #allocation6 [shape = 'u8[131072]{0}', space=vmem, size = 0x20000, scoped, tag = 'input window, operand 2, single buffered']
    #allocation7 [shape = 's32[1]{0}', space=sflag, size = 0x4, scoped, tag = 'scoped memory for tpu_custom_call.1']
    #allocation8 [shape = 'u8[131072]{0}', space=vmem, size = 0x20000, scoped, tag = 'input window, operand 4, single buffered']
    #allocation9 [shape = 'u8[2048]{0}', space=vmem, size = 0x800, scoped, tag = 'output window, operand 0, single buffered']
    %13 = vsyncpa [#allocation4], 0
    %14 = vsyncpa [#allocation7], 0
    %15 = vsyncpa [#allocation5], 0
    // Predicated region
    $region2: #{tpu_custom_call.1} parent=1 // pred_check
      _
    $region3: #{tpu_custom_call.1} parent=1 // pred_check_branch
      %17 = sbr.rel (0) target = $region5
    $region4: #{tpu_custom_call.1} parent=1 // pred_region
      %s19 = ssub.s32 256, 256
      %20 = vsyncadd [#allocation4], %s19
      %s21 = sshll.u32 [#allocation3], 4
      %s22 = int_to_ptr.vmem [resolvable:$true] %s21
      %27 = dma.hbm_to_vmem [thread:$0]  %s0, 256, %s22, [#allocation4], 128, 128, 8
    $region5: #{tpu_custom_call.1} parent=1 // pred_fallthru
      _
    // Predicated region
    $region6: #{tpu_custom_call.1} parent=1 // pred_check
      _
    $region7: #{tpu_custom_call.1} parent=1 // pred_check_branch
      %29 = sbr.rel (0) target = $region9
    $region8: #{tpu_custom_call.1} parent=1 // pred_region
      _
    $region9: #{tpu_custom_call.1} parent=1 // pred_fallthru
      _
    // Predicated region
    $region10: #{tpu_custom_call.1} parent=1 // pred_check
      _
    $region11: #{tpu_custom_call.1} parent=1 // pred_check_branch
      %31 = sbr.rel (0) target = $region13
    $region12: #{tpu_custom_call.1} parent=1 // pred_region
      %s33 = ssub.s32 4096, 4096
      %34 = vsyncadd [#allocation7], %s33
      %s35 = sshll.u32 [#allocation6], 4
      %s36 = int_to_ptr.vmem [resolvable:$true] %s35
      %41 = dma.hbm_to_vmem [thread:$0]  %s2, 4096, %s36, [#allocation7], 128, 128, 8
    $region13: #{tpu_custom_call.1} parent=1 // pred_fallthru
      _
    // Predicated region
    $region14: #{tpu_custom_call.1} parent=1 // pred_check
      _
    $region15: #{tpu_custom_call.1} parent=1 // pred_check_branch
      %43 = sbr.rel (0) target = $region17
    $region16: #{tpu_custom_call.1} parent=1 // pred_region
      _
    $region17: #{tpu_custom_call.1} parent=1 // pred_fallthru
      _
    // Predicated region
    $region18: #{tpu_custom_call.1} parent=1 // pred_check
      _
    $region19: #{tpu_custom_call.1} parent=1 // pred_check_branch
      %45 = sbr.rel (0) target = $region21
    $region20: #{tpu_custom_call.1} parent=1 // pred_region
      %s47 = ssub.s32 4096, 4096
      %48 = vsyncadd [#allocation7], %s47
      %s49 = sshll.u32 [#allocation8], 4
      %s50 = int_to_ptr.vmem [resolvable:$true] %s49
      %55 = dma.hbm_to_vmem [thread:$0]  %s4, 4096, %s50, [#allocation7], 128, 128, 8
    $region21: #{tpu_custom_call.1} parent=1 // pred_fallthru
      _
    // Predicated region
    $region22: #{tpu_custom_call.1} parent=1 // pred_check
      _
    $region23: #{tpu_custom_call.1} parent=1 // pred_check_branch
      %57 = sbr.rel (0) target = $region25
    $region24: #{tpu_custom_call.1} parent=1 // pred_region
      _
    $region25: #{tpu_custom_call.1} parent=1 // pred_fallthru
      _
    // Predicated region
    $region26: #{tpu_custom_call.1} parent=1 // pred_check
      _
    $region27: #{tpu_custom_call.1} parent=1 // pred_check_branch
      %59 = sbr.rel (0) target = $region29
    $region28: #{tpu_custom_call.1} parent=1 // pred_region
      _
    $region29: #{tpu_custom_call.1} parent=1 // pred_fallthru
      _
    // Predicated region
    $region30: #{tpu_custom_call.1} parent=1 // pred_check
      _
    $region31: #{tpu_custom_call.1} parent=1 // pred_check_branch
      %61 = sbr.rel (0) target = $region33
    $region32: #{tpu_custom_call.1} parent=1 // pred_region
      %62 = dma.done [#allocation4], 256
    $region33: #{tpu_custom_call.1} parent=1 // pred_fallthru
      _
    // Predicated region
    $region34: #{tpu_custom_call.1} parent=1 // pred_check
      _
    $region35: #{tpu_custom_call.1} parent=1 // pred_check_branch
      %64 = sbr.rel (0) target = $region37
    $region36: #{tpu_custom_call.1} parent=1 // pred_region
      %65 = dma.done [#allocation7], 4096
    $region37: #{tpu_custom_call.1} parent=1 // pred_fallthru
      _
    // Predicated region
    $region38: #{tpu_custom_call.1} parent=1 // pred_check
      _
    $region39: #{tpu_custom_call.1} parent=1 // pred_check_branch
      %67 = sbr.rel (0) target = $region41
    $region40: #{tpu_custom_call.1} parent=1 // pred_region
      %68 = dma.done [#allocation7], 4096
    $region41: #{tpu_custom_call.1} parent=1 // pred_fallthru
      _
    %v69 = vld [vmem:[#allocation3] sm:$0xff]
    %v70 = vld [vmem:[#allocation3 + $0x8] sm:$0xff]
    %v71 = vld [vmem:[#allocation6] sm:$0xff]
    %v72 = vld [vmem:[#allocation6 + $0x8] sm:$0xff]
    %v73 = vld [vmem:[#allocation6 + $0x10] sm:$0xff]
    %v74 = vld [vmem:[#allocation6 + $0x18] sm:$0xff]
    %v75 = vld [vmem:[#allocation6 + $0x20] sm:$0xff]
    %v76 = vld [vmem:[#allocation6 + $0x28] sm:$0xff]
    %v77 = vld [vmem:[#allocation6 + $0x30] sm:$0xff]
    %v78 = vld [vmem:[#allocation6 + $0x38] sm:$0xff]
    %v79 = vld [vmem:[#allocation6 + $0x40] sm:$0xff]
    %v80 = vld [vmem:[#allocation6 + $0x48] sm:$0xff]
    %v81 = vld [vmem:[#allocation6 + $0x50] sm:$0xff]
    %v82 = vld [vmem:[#allocation6 + $0x58] sm:$0xff]
    %v83 = vld [vmem:[#allocation6 + $0x60] sm:$0xff]
    %v84 = vld [vmem:[#allocation6 + $0x68] sm:$0xff]
    %v85 = vld [vmem:[#allocation6 + $0x70] sm:$0xff]
    %v86 = vld [vmem:[#allocation6 + $0x78] sm:$0xff]
    %v87 = vld [vmem:[#allocation6 + $0x80] sm:$0xff]
    %v88 = vld [vmem:[#allocation6 + $0x88] sm:$0xff]
    %v89 = vld [vmem:[#allocation6 + $0x90] sm:$0xff]
    %v90 = vld [vmem:[#allocation6 + $0x98] sm:$0xff]
    %v91 = vld [vmem:[#allocation6 + $0xa0] sm:$0xff]
    %v92 = vld [vmem:[#allocation6 + $0xa8] sm:$0xff]
    %v93 = vld [vmem:[#allocation6 + $0xb0] sm:$0xff]
    %v94 = vld [vmem:[#allocation6 + $0xb8] sm:$0xff]
    %v95 = vld [vmem:[#allocation6 + $0xc0] sm:$0xff]
    %v96 = vld [vmem:[#allocation6 + $0xc8] sm:$0xff]
    %v97 = vld [vmem:[#allocation6 + $0xd0] sm:$0xff]
    %v98 = vld [vmem:[#allocation6 + $0xd8] sm:$0xff]
    %v99 = vld [vmem:[#allocation6 + $0xe0] sm:$0xff]
    %v100 = vld [vmem:[#allocation6 + $0xe8] sm:$0xff]
    %v101 = vld [vmem:[#allocation6 + $0xf0] sm:$0xff]
    %v102 = vld [vmem:[#allocation6 + $0xf8] sm:$0xff]
    %v105 = vunpack.c.l.b16 %v69
    %v106 = vunpack.c.h.b16 %v69
    %v107 = vunpack.c.l.b16 %v70
    %v108 = vunpack.c.h.b16 %v70
    %v109 = vpack.c.b16 %v107, %v105
    %v110 = vpack.c.b16 %v108, %v106
    %v145 = vunpack.c.l.b16 %v71
    %v146 = vunpack.c.h.b16 %v71
    %v147 = vunpack.c.l.b16 %v72
    %v148 = vunpack.c.h.b16 %v72
    %v149 = vunpack.c.l.b16 %v73
    %v150 = vunpack.c.h.b16 %v73
    %v151 = vunpack.c.l.b16 %v74
    %v152 = vunpack.c.h.b16 %v74
    %v153 = vunpack.c.l.b16 %v75
    %v154 = vunpack.c.h.b16 %v75
    %v155 = vunpack.c.l.b16 %v76
    %v156 = vunpack.c.h.b16 %v76
    %v157 = vunpack.c.l.b16 %v77
    %v158 = vunpack.c.h.b16 %v77
    %v159 = vunpack.c.l.b16 %v78
    %v160 = vunpack.c.h.b16 %v78
    %v161 = vunpack.c.l.b16 %v79
    %v162 = vunpack.c.h.b16 %v79
    %v163 = vunpack.c.l.b16 %v80
    %v164 = vunpack.c.h.b16 %v80
    %v165 = vunpack.c.l.b16 %v81
    %v166 = vunpack.c.h.b16 %v81
    %v167 = vunpack.c.l.b16 %v82
    %v168 = vunpack.c.h.b16 %v82
    %v169 = vunpack.c.l.b16 %v83
    %v170 = vunpack.c.h.b16 %v83
    %v171 = vunpack.c.l.b16 %v84
    %v172 = vunpack.c.h.b16 %v84
    %v173 = vunpack.c.l.b16 %v85
    %v174 = vunpack.c.h.b16 %v85
    %v175 = vunpack.c.l.b16 %v86
    %v176 = vunpack.c.h.b16 %v86
    %v177 = vunpack.c.l.b16 %v87
    %v178 = vunpack.c.h.b16 %v87
    %v179 = vunpack.c.l.b16 %v88
    %v180 = vunpack.c.h.b16 %v88
    %v181 = vunpack.c.l.b16 %v89
    %v182 = vunpack.c.h.b16 %v89
    %v183 = vunpack.c.l.b16 %v90
    %v184 = vunpack.c.h.b16 %v90
    %v185 = vunpack.c.l.b16 %v91
    %v186 = vunpack.c.h.b16 %v91
    %v187 = vunpack.c.l.b16 %v92
    %v188 = vunpack.c.h.b16 %v92
    %v189 = vunpack.c.l.b16 %v93
    %v190 = vunpack.c.h.b16 %v93
    %v191 = vunpack.c.l.b16 %v94
    %v192 = vunpack.c.h.b16 %v94
    %v193 = vunpack.c.l.b16 %v95
    %v194 = vunpack.c.h.b16 %v95
    %v195 = vunpack.c.l.b16 %v96
    %v196 = vunpack.c.h.b16 %v96
    %v197 = vunpack.c.l.b16 %v97
    %v198 = vunpack.c.h.b16 %v97
    %v199 = vunpack.c.l.b16 %v98
    %v200 = vunpack.c.h.b16 %v98
    %v201 = vunpack.c.l.b16 %v99
    %v202 = vunpack.c.h.b16 %v99
    %v203 = vunpack.c.l.b16 %v100
    %v204 = vunpack.c.h.b16 %v100
    %v205 = vunpack.c.l.b16 %v101
    %v206 = vunpack.c.h.b16 %v101
    %v207 = vunpack.c.l.b16 %v102
    %v208 = vunpack.c.h.b16 %v102
    %v209 = vpack.c.b16 %v147, %v145
    %v210 = vpack.c.b16 %v148, %v146
    %v211 = vpack.c.b16 %v151, %v149
    %v212 = vpack.c.b16 %v152, %v150
    %v213 = vpack.c.b16 %v155, %v153
    %v214 = vpack.c.b16 %v156, %v154
    %v215 = vpack.c.b16 %v159, %v157
    %v216 = vpack.c.b16 %v160, %v158
    %v217 = vpack.c.b16 %v163, %v161
    %v218 = vpack.c.b16 %v164, %v162
    %v219 = vpack.c.b16 %v167, %v165
    %v220 = vpack.c.b16 %v168, %v166
    %v221 = vpack.c.b16 %v171, %v169
    %v222 = vpack.c.b16 %v172, %v170
    %v223 = vpack.c.b16 %v175, %v173
    %v224 = vpack.c.b16 %v176, %v174
    %v225 = vpack.c.b16 %v179, %v177
    %v226 = vpack.c.b16 %v180, %v178
    %v227 = vpack.c.b16 %v183, %v181
    %v228 = vpack.c.b16 %v184, %v182
    %v229 = vpack.c.b16 %v187, %v185
    %v230 = vpack.c.b16 %v188, %v186
    %v231 = vpack.c.b16 %v191, %v189
    %v232 = vpack.c.b16 %v192, %v190
    %v233 = vpack.c.b16 %v195, %v193
    %v234 = vpack.c.b16 %v196, %v194
    %v235 = vpack.c.b16 %v199, %v197
    %v236 = vpack.c.b16 %v200, %v198
    %v237 = vpack.c.b16 %v203, %v201
    %v238 = vpack.c.b16 %v204, %v202
    %v239 = vpack.c.b16 %v207, %v205
    %v240 = vpack.c.b16 %v208, %v206
    %273 = vmatprep.subr.bf16.mxu0 %v210
    %274 = vmatpush1.bf16.msra.mxu0 %v209
    %275 = vmatprep.subr.bf16.mxu0 %v212
    %276 = vmatpush1.bf16.msra.mxu0 %v211
    %277 = vmatprep.subr.bf16.mxu0 %v214
    %278 = vmatpush1.bf16.msra.mxu0 %v213
    %279 = vmatprep.subr.bf16.mxu0 %v216
    %280 = vmatpush1.bf16.msra.mxu0 %v215
    %281 = vmatprep.subr.bf16.mxu0 %v218
    %282 = vmatpush1.bf16.msra.mxu0 %v217
    %283 = vmatprep.subr.bf16.mxu0 %v220
    %284 = vmatpush1.bf16.msra.mxu0 %v219
    %285 = vmatprep.subr.bf16.mxu0 %v222
    %286 = vmatpush1.bf16.msra.mxu0 %v221
    %287 = vmatprep.subr.bf16.mxu0 %v224
    %288 = vmatpush1.bf16.msra.mxu0 %v223
    %289 = vmatprep.subr.bf16.mxu0 %v226
    %290 = vmatpush1.bf16.msra.mxu0 %v225
    %291 = vmatprep.subr.bf16.mxu0 %v228
    %292 = vmatpush1.bf16.msra.mxu0 %v227
    %293 = vmatprep.subr.bf16.mxu0 %v230
    %294 = vmatpush1.bf16.msra.mxu0 %v229
    %295 = vmatprep.subr.bf16.mxu0 %v232
    %296 = vmatpush1.bf16.msra.mxu0 %v231
    %297 = vmatprep.subr.bf16.mxu0 %v234
    %298 = vmatpush1.bf16.msra.mxu0 %v233
    %299 = vmatprep.subr.bf16.mxu0 %v236
    %300 = vmatpush1.bf16.msra.mxu0 %v235
    %301 = vmatprep.subr.bf16.mxu0 %v238
    %302 = vmatpush1.bf16.msra.mxu0 %v237
    %303 = vmatprep.subr.bf16.mxu0 %v240
    %304 = vmatpush1.bf16.msra.mxu0 %v239
    %305 = vmatprep.mubr.bf16.mxu0 %v110
    %306 = vmatmul.mubr.bf16.gmra.mrb[0].mxu0 %v109
    %v307 = vpop.f32.mrb[0].mxu0
    %v308 = vadd.f32 0.0, %v307
    %v309 = vpop.f32.mrb[0].mxu0
    %v310 = vadd.f32 0.0, %v309
    %v311 = vpop.f32.mrb[0].mxu0
    %v312 = vadd.f32 0.0, %v311
    %v313 = vpop.f32.mrb[0].mxu0
    %v314 = vadd.f32 0.0, %v313
    %315 = vdwg.mxu0
    %v316 = vld [vmem:[%s1] sm:$0x3]
    %v317 = vld [vmem:[#allocation8] sm:$0xff]
    %v318 = vld [vmem:[#allocation8 + $0x8] sm:$0xff]
    %v319 = vld [vmem:[#allocation8 + $0x10] sm:$0xff]
    %v320 = vld [vmem:[#allocation8 + $0x18] sm:$0xff]
    %v321 = vld [vmem:[#allocation8 + $0x20] sm:$0xff]
    %v322 = vld [vmem:[#allocation8 + $0x28] sm:$0xff]
    %v323 = vld [vmem:[#allocation8 + $0x30] sm:$0xff]
    %v324 = vld [vmem:[#allocation8 + $0x38] sm:$0xff]
    %v325 = vld [vmem:[#allocation8 + $0x40] sm:$0xff]
    %v326 = vld [vmem:[#allocation8 + $0x48] sm:$0xff]
    %v327 = vld [vmem:[#allocation8 + $0x50] sm:$0xff]
    %v328 = vld [vmem:[#allocation8 + $0x58] sm:$0xff]
    %v329 = vld [vmem:[#allocation8 + $0x60] sm:$0xff]
    %v330 = vld [vmem:[#allocation8 + $0x68] sm:$0xff]
    %v331 = vld [vmem:[#allocation8 + $0x70] sm:$0xff]
    %v332 = vld [vmem:[#allocation8 + $0x78] sm:$0xff]
    %v333 = vld [vmem:[#allocation8 + $0x80] sm:$0xff]
    %v334 = vld [vmem:[#allocation8 + $0x88] sm:$0xff]
    %v335 = vld [vmem:[#allocation8 + $0x90] sm:$0xff]
    %v336 = vld [vmem:[#allocation8 + $0x98] sm:$0xff]
    %v337 = vld [vmem:[#allocation8 + $0xa0] sm:$0xff]
    %v338 = vld [vmem:[#allocation8 + $0xa8] sm:$0xff]
    %v339 = vld [vmem:[#allocation8 + $0xb0] sm:$0xff]
    %v340 = vld [vmem:[#allocation8 + $0xb8] sm:$0xff]
    %v341 = vld [vmem:[#allocation8 + $0xc0] sm:$0xff]
    %v342 = vld [vmem:[#allocation8 + $0xc8] sm:$0xff]
    %v343 = vld [vmem:[#allocation8 + $0xd0] sm:$0xff]
    %v344 = vld [vmem:[#allocation8 + $0xd8] sm:$0xff]
    %v345 = vld [vmem:[#allocation8 + $0xe0] sm:$0xff]
    %v346 = vld [vmem:[#allocation8 + $0xe8] sm:$0xff]
    %v347 = vld [vmem:[#allocation8 + $0xf0] sm:$0xff]
    %v348 = vld [vmem:[#allocation8 + $0xf8] sm:$0xff]
    %v351 = vunpack.c.l.s4 1966171168
    %v352 = vunpack.c.0.s8 %v351
    %v353 = vlaneseq
    %v354 = vshrl.u32 %v353, 7
    %v355 = vsub.s32 %v352, %v354
    %v356 = vrot.slane %v316, %v355
    %v357 = vcombine.high %v356, %v356
    %v359 = vunpack.c.l.s4 1966171168
    %v360 = vunpack.c.0.s8 %v359
    %v361 = vlaneseq
    %v362 = vshrl.u32 %v361, 7
    %v363 = vsub.s32 %v360, %v362
    %v364 = vrot.slane %v356, %v363
    %v366 = vunpack.c.l.s4 1966171168
    %v367 = vunpack.c.0.s8 %v366
    %v368 = vlaneseq
    %v369 = vshrl.u32 %v368, 7
    %v370 = vsub.s32 %v367, %v369
    %v371 = vrot.slane %v357, %v370
    %v406 = vunpack.c.l.b16 %v317
    %v407 = vunpack.c.h.b16 %v317
    %v408 = vunpack.c.l.b16 %v318
    %v409 = vunpack.c.h.b16 %v318
    %v410 = vunpack.c.l.b16 %v319
    %v411 = vunpack.c.h.b16 %v319
    %v412 = vunpack.c.l.b16 %v320
    %v413 = vunpack.c.h.b16 %v320
    %v414 = vunpack.c.l.b16 %v321
    %v415 = vunpack.c.h.b16 %v321
    %v416 = vunpack.c.l.b16 %v322
    %v417 = vunpack.c.h.b16 %v322
    %v418 = vunpack.c.l.b16 %v323
    %v419 = vunpack.c.h.b16 %v323
    %v420 = vunpack.c.l.b16 %v324
    %v421 = vunpack.c.h.b16 %v324
    %v422 = vunpack.c.l.b16 %v325
    %v423 = vunpack.c.h.b16 %v325
    %v424 = vunpack.c.l.b16 %v326
    %v425 = vunpack.c.h.b16 %v326
    %v426 = vunpack.c.l.b16 %v327
    %v427 = vunpack.c.h.b16 %v327
    %v428 = vunpack.c.l.b16 %v328
    %v429 = vunpack.c.h.b16 %v328
    %v430 = vunpack.c.l.b16 %v329
    %v431 = vunpack.c.h.b16 %v329
    %v432 = vunpack.c.l.b16 %v330
    %v433 = vunpack.c.h.b16 %v330
    %v434 = vunpack.c.l.b16 %v331
    %v435 = vunpack.c.h.b16 %v331
    %v436 = vunpack.c.l.b16 %v332
    %v437 = vunpack.c.h.b16 %v332
    %v438 = vunpack.c.l.b16 %v333
    %v439 = vunpack.c.h.b16 %v333
    %v440 = vunpack.c.l.b16 %v334
    %v441 = vunpack.c.h.b16 %v334
    %v442 = vunpack.c.l.b16 %v335
    %v443 = vunpack.c.h.b16 %v335
    %v444 = vunpack.c.l.b16 %v336
    %v445 = vunpack.c.h.b16 %v336
    %v446 = vunpack.c.l.b16 %v337
    %v447 = vunpack.c.h.b16 %v337
    %v448 = vunpack.c.l.b16 %v338
    %v449 = vunpack.c.h.b16 %v338
    %v450 = vunpack.c.l.b16 %v339
    %v451 = vunpack.c.h.b16 %v339
    %v452 = vunpack.c.l.b16 %v340
    %v453 = vunpack.c.h.b16 %v340
    %v454 = vunpack.c.l.b16 %v341
    %v455 = vunpack.c.h.b16 %v341
    %v456 = vunpack.c.l.b16 %v342
    %v457 = vunpack.c.h.b16 %v342
    %v458 = vunpack.c.l.b16 %v343
    %v459 = vunpack.c.h.b16 %v343
    %v460 = vunpack.c.l.b16 %v344
    %v461 = vunpack.c.h.b16 %v344
    %v462 = vunpack.c.l.b16 %v345
    %v463 = vunpack.c.h.b16 %v345
    %v464 = vunpack.c.l.b16 %v346
    %v465 = vunpack.c.h.b16 %v346
    %v466 = vunpack.c.l.b16 %v347
    %v467 = vunpack.c.h.b16 %v347
    %v468 = vunpack.c.l.b16 %v348
    %v469 = vunpack.c.h.b16 %v348
    %v470 = vpack.c.b16 %v408, %v406
    %v471 = vpack.c.b16 %v409, %v407
    %v472 = vpack.c.b16 %v412, %v410
    %v473 = vpack.c.b16 %v413, %v411
    %v474 = vpack.c.b16 %v416, %v414
    %v475 = vpack.c.b16 %v417, %v415
    %v476 = vpack.c.b16 %v420, %v418
    %v477 = vpack.c.b16 %v421, %v419
    %v478 = vpack.c.b16 %v424, %v422
    %v479 = vpack.c.b16 %v425, %v423
    %v480 = vpack.c.b16 %v428, %v426
    %v481 = vpack.c.b16 %v429, %v427
    %v482 = vpack.c.b16 %v432, %v430
    %v483 = vpack.c.b16 %v433, %v431
    %v484 = vpack.c.b16 %v436, %v434
    %v485 = vpack.c.b16 %v437, %v435
    %v486 = vpack.c.b16 %v440, %v438
    %v487 = vpack.c.b16 %v441, %v439
    %v488 = vpack.c.b16 %v444, %v442
    %v489 = vpack.c.b16 %v445, %v443
    %v490 = vpack.c.b16 %v448, %v446
    %v491 = vpack.c.b16 %v449, %v447
    %v492 = vpack.c.b16 %v452, %v450
    %v493 = vpack.c.b16 %v453, %v451
    %v494 = vpack.c.b16 %v456, %v454
    %v495 = vpack.c.b16 %v457, %v455
    %v496 = vpack.c.b16 %v460, %v458
    %v497 = vpack.c.b16 %v461, %v459
    %v498 = vpack.c.b16 %v464, %v462
    %v499 = vpack.c.b16 %v465, %v463
    %v500 = vpack.c.b16 %v468, %v466
    %v501 = vpack.c.b16 %v469, %v467
    %534 = vmatprep.subr.bf16.mxu0 %v471
    %535 = vmatpush1.bf16.msra.mxu0 %v470
    %536 = vmatprep.subr.bf16.mxu0 %v473
    %537 = vmatpush1.bf16.msra.mxu0 %v472
    %538 = vmatprep.subr.bf16.mxu0 %v475
    %539 = vmatpush1.bf16.msra.mxu0 %v474
    %540 = vmatprep.subr.bf16.mxu0 %v477
    %541 = vmatpush1.bf16.msra.mxu0 %v476
    %542 = vmatprep.subr.bf16.mxu0 %v479
    %543 = vmatpush1.bf16.msra.mxu0 %v478
    %544 = vmatprep.subr.bf16.mxu0 %v481
    %545 = vmatpush1.bf16.msra.mxu0 %v480
    %546 = vmatprep.subr.bf16.mxu0 %v483
    %547 = vmatpush1.bf16.msra.mxu0 %v482
    %548 = vmatprep.subr.bf16.mxu0 %v485
    %549 = vmatpush1.bf16.msra.mxu0 %v484
    %550 = vmatprep.subr.bf16.mxu0 %v487
    %551 = vmatpush1.bf16.msra.mxu0 %v486
    %552 = vmatprep.subr.bf16.mxu0 %v489
    %553 = vmatpush1.bf16.msra.mxu0 %v488
    %554 = vmatprep.subr.bf16.mxu0 %v491
    %555 = vmatpush1.bf16.msra.mxu0 %v490
    %556 = vmatprep.subr.bf16.mxu0 %v493
    %557 = vmatpush1.bf16.msra.mxu0 %v492
    %558 = vmatprep.subr.bf16.mxu0 %v495
    %559 = vmatpush1.bf16.msra.mxu0 %v494
    %560 = vmatprep.subr.bf16.mxu0 %v497
    %561 = vmatpush1.bf16.msra.mxu0 %v496
    %562 = vmatprep.subr.bf16.mxu0 %v499
    %563 = vmatpush1.bf16.msra.mxu0 %v498
    %564 = vmatprep.subr.bf16.mxu0 %v501
    %565 = vmatpush1.bf16.msra.mxu0 %v500
    %566 = vmatprep.mubr.bf16.mxu0 %v371
    %567 = vmatmul.mubr.bf16.gmra.mrb[0].mxu0 %v364
    %v568 = vpop.f32.mrb[0].mxu0
    %v569 = vadd.f32 0.0, %v568
    %v570 = vpop.f32.mrb[0].mxu0
    %v571 = vadd.f32 0.0, %v570
    %v572 = vpop.f32.mrb[0].mxu0
    %v573 = vpop.f32.mrb[0].mxu0
    %574 = vdwg.mxu0
    %v575 = vld [vmem:[%s3] sm:$0x3]
    %v577 = vlaneseq
    %v578 = vshrl.u32 %v577, 7
    %v579 = vsub.s32 0, %v578
    %v580 = vrot.slane %v575, %v579
    %v581 = vlaneseq
    %v582 = vshrl.u32 %v581, 7
    %v583 = vsub.s32 1, %v582
    %v584 = vrot.slane %v575, %v583
    %v587 = vadd.f32 %v308, %v580
    %v588 = vadd.f32 %v310, %v584
    %v589 = vadd.f32 %v312, %v580
    %v590 = vadd.f32 %v314, %v584
    %v593 = vcombine.low %v569, %v571
    %v595 = vunpack.c.l.s4 1966171168
    %v596 = vunpack.c.0.s8 %v595
    %v597 = vlaneseq
    %v598 = vshrl.u32 %v597, 7
    %v599 = vsub.s32 %v596, %v598
    %v600 = vrot.slane %v593, %v599
    %v601 = vcombine.high %v600, %v600
    %v603 = vunpack.c.l.s4 1966171168
    %v604 = vunpack.c.0.s8 %v603
    %v605 = vlaneseq
    %v606 = vshrl.u32 %v605, 7
    %v607 = vsub.s32 %v604, %v606
    %v608 = vrot.slane %v600, %v607
    %v610 = vunpack.c.l.s4 1966171168
    %v611 = vunpack.c.0.s8 %v610
    %v612 = vlaneseq
    %v613 = vshrl.u32 %v612, 7
    %v614 = vsub.s32 %v611, %v613
    %v615 = vrot.slane %v601, %v614
    %v616 = vlaneseq
    %v617 = vshrl.u32 %v616, 7
    %v618 = vsub.s32 0, %v617
    %v619 = vrot.slane %v608, %v618
    %v620 = vlaneseq
    %v621 = vshrl.u32 %v620, 7
    %v622 = vsub.s32 1, %v621
    %v623 = vrot.slane %v608, %v622
    %v624 = vlaneseq
    %v625 = vshrl.u32 %v624, 7
    %v626 = vsub.s32 0, %v625
    %v627 = vrot.slane %v615, %v626
    %v628 = vlaneseq
    %v629 = vshrl.u32 %v628, 7
    %v630 = vsub.s32 1, %v629
    %v631 = vrot.slane %v615, %v630
    %v636 = vadd.f32 %v587, %v619
    %v637 = vadd.f32 %v588, %v623
    %v638 = vadd.f32 %v589, %v627
    %v639 = vadd.f32 %v590, %v631
    %v640 = vtanh.pop %v636
    %v641 = vtanh.pop %v637
    %v642 = vtanh.pop %v638
    %v643 = vtanh.pop %v639
    %v644 = vld [vmem:[%s5] sm:$0x3]
    %v646 = vlaneseq
    %v647 = vshrl.u32 %v646, 7
    %v648 = vsub.s32 0, %v647
    %v649 = vrot.slane %v644, %v648
    %v650 = vlaneseq
    %v651 = vshrl.u32 %v650, 7
    %v652 = vsub.s32 1, %v651
    %v653 = vrot.slane %v644, %v652
    %v656 = vmul.f32 %v640, %v649
    %v657 = vmul.f32 %v641, %v653
    %v658 = vmul.f32 %v642, %v649
    %v659 = vmul.f32 %v643, %v653
    %v660 = vadd.f32 %v656, %v657
    %661 = vadd.xlane.f32.xlu0 %v660
    %v662 = vpop.xlane.xlu0 %661
    %v663 = vadd.f32 %v658, %v659
    %664 = vadd.xlane.f32.xlu0 %v663
    %v665 = vpop.xlane.xlu0 %664
    %s666 = sld [smem:[#allocation2]]
    %v667 = vstv %s666
    %v668 = vadd.f32 %v662, %v667
    %v669 = vadd.f32 %v665, %v667
    %v672 = vlaneseq
    %v673 = vand.u32 %v672, 127
    %v674 = vlaneseq
    %v675 = vshrl.u32 %v674, 7
    %v676 = vsub.s32 %v673, %v675
    %v677 = vrot.slane %v668, %v676
    %v678 = vlaneseq
    %v679 = vshrl.u32 %v678, 7
    %v680 = vsub.s32 %v673, %v679
    %v681 = vrot.slane %v669, %v680
    %vm682 = vcmask 1041409
    %v683 = vsel %vm682, %v681, %v677
    %vm685 = vcmask 58368
    %v686 = vsel %vm685, %v683, -inf
    %687 = vmax.xlane.f32.xlu0 %v686
    %v688 = vpop.xlane.xlu0 %687
    %v690 = vlaneseq
    %v691 = vshrl.u32 %v690, 7
    %v692 = vsub.s32 0, %v691
    %v693 = vrot.slane %v688, %v692
    %v694 = vlaneseq
    %v695 = vshrl.u32 %v694, 7
    %v696 = vsub.s32 1, %v695
    %v697 = vrot.slane %v688, %v696
    %v700 = vsub.f32 %v668, %v693
    %v701 = vsub.f32 %v669, %v697
    %v702 = vmul.f32 %v700, 1.442695
    %v703 = vpow.pop %v702
    %v704 = vmul.f32 %v701, 1.442695
    %v705 = vpow.pop %v704
    %708 = vset.pattern.permute.xlu0 0
    %709 = vperm.xlu0 %708, %v703
    %v710 = vpop.permute.xlu0 %709
    %711 = vset.pattern.permute.xlu0 0
    %712 = vperm.xlu0 %711, %v705
    %v713 = vpop.permute.xlu0 %712
    %v714 = vlaneseq
    %v715 = vshrl.u32 %v714, 7
    %v716 = vsub.s32 %v673, %v715
    %v717 = vrot.slane %v710, %v716
    %v718 = vlaneseq
    %v719 = vshrl.u32 %v718, 7
    %v720 = vsub.s32 %v673, %v719
    %v721 = vrot.slane %v713, %v720
    %v722 = vsel %vm682, %v721, %v717
    %v724 = vsel %vm685, %v722, 0.0
    %725 = vadd.xlane.f32.xlu0 %v724
    %v726 = vpop.xlane.xlu0 %725
    %v727 = vrcp.pop %v726
    %v729 = vlaneseq
    %v730 = vshrl.u32 %v729, 7
    %v731 = vsub.s32 0, %v730
    %v732 = vrot.slane %v727, %v731
    %v733 = vlaneseq
    %v734 = vshrl.u32 %v733, 7
    %v735 = vsub.s32 1, %v734
    %v736 = vrot.slane %v727, %v735
    %v739 = vmul.f32 %v703, %v732
    %v740 = vmul.f32 %v705, %v736
    %v741 = vunpack.c.l.bf16 %v69
    %v742 = vunpack.c.h.bf16 %v69
    %v743 = vunpack.c.l.bf16 %v70
    %v744 = vunpack.c.h.bf16 %v70
    %746 = vset.pattern.permute.xlu0 0
    %747 = vperm.xlu0 %746, %v739
    %v748 = vpop.permute.xlu0 %747
    %751 = vset.pattern.permute.xlu0 0
    %752 = vperm.xlu0 %751, %v740
    %v753 = vpop.permute.xlu0 %752
    %v755 = vmul.f32 %v748, %v741
    %v756 = vmul.f32 %v748, %v742
    %v757 = vmul.f32 %v753, %v743
    %v758 = vmul.f32 %v753, %v744
    %v759 = vrot.slane %v755, 4
    %v760 = vadd.f32 %v755, %v759
    %v761 = vrot.slane %v760, 2
    %v762 = vadd.f32 %v760, %v761
    %v763 = vrot.slane %v762, 1
    %v764 = vadd.f32 %v762, %v763
    %v765 = vrot.slane %v756, 4
    %v766 = vadd.f32 %v756, %v765
    %v767 = vrot.slane %v766, 2
    %v768 = vadd.f32 %v766, %v767
    %v769 = vrot.slane %v768, 1
    %v770 = vadd.f32 %v768, %v769
    %v771 = vrot.slane %v757, 4
    %v772 = vadd.f32 %v757, %v771
    %v773 = vrot.slane %v772, 2
    %v774 = vadd.f32 %v772, %v773
    %v775 = vrot.slane %v774, 1
    %v776 = vadd.f32 %v774, %v775
    %v777 = vrot.slane %v758, 4
    %v778 = vadd.f32 %v758, %v777
    %v779 = vrot.slane %v778, 2
    %v780 = vadd.f32 %v778, %v779
    %v781 = vrot.slane %v780, 1
    %v782 = vadd.f32 %v780, %v781
    %v787 = vcombine.low %v764, %v770
    %v789 = vunpack.c.l.s4 1983009808
    %v790 = vunpack.c.0.s8 %v789
    %v791 = vlaneseq
    %v792 = vshrl.u32 %v791, 7
    %v793 = vsub.s32 %v790, %v792
    %v794 = vrot.slane %v787, %v793
    %v795 = vcombine.low %v776, %v782
    %v797 = vunpack.c.l.s4 1983009808
    %v798 = vunpack.c.0.s8 %v797
    %v799 = vlaneseq
    %v800 = vshrl.u32 %v799, 7
    %v801 = vsub.s32 %v798, %v800
    %v802 = vrot.slane %v795, %v801
    %vm803 = vcmask 1044484
    %v804 = vsel %vm803, %v794, %v794
    %vm805 = vcmask 1046534
    %v806 = vsel %vm805, %v794, %v804
    %v807 = vrot.slane %v802, 7
    %v808 = vsel %vm682, %v807, %v806
    %vm809 = vcmask 1043459
    %v810 = vsel %vm809, %v807, %v808
    %vm811 = vcmask 1045509
    %v812 = vsel %vm811, %v807, %v810
    %vm813 = vcmask 1047559
    %v814 = vsel %vm813, %v807, %v812
    %816 = vst [vmem:[#allocation9] sm:$0xf] %v814
    // Predicated region
    $region42: #{tpu_custom_call.1} parent=1 // pred_check
      _
    $region43: #{tpu_custom_call.1} parent=1 // pred_check_branch
      %818 = sbr.rel (0) target = $region45
    $region44: #{tpu_custom_call.1} parent=1 // pred_region
      %s820 = ssub.s32 64, 64
      %821 = vsyncadd [#allocation5], %s820
      %s823 = sshll.u32 [#allocation9], 4
      %s824 = int_to_ptr.vmem [resolvable:$true] %s823
      %826 = dma.vmem_to_hbm [thread:$0]  %s824, 64, %s7, [#allocation5]
    $region45: #{tpu_custom_call.1} parent=1 // pred_fallthru
      _
    // Predicated region
    $region46: #{tpu_custom_call.1} parent=1 // pred_check
      _
    $region47: #{tpu_custom_call.1} parent=1 // pred_check_branch
      %828 = sbr.rel (0) target = $region49
    $region48: #{tpu_custom_call.1} parent=1 // pred_region
      %829 = dma.done [#allocation5], 64
    $region49: #{tpu_custom_call.1} parent=1 // pred_fallthru
      _
    %830 = vsyncpa [#allocation4], 1
    %831 = vsyncpa [#allocation7], 1
    %832 = vsyncpa [#allocation5], 1

</llo_original>
